<compile_context>
chip_gen: v7x
topology: tpu7x:2x2x1
jax: 0.10.0
libtpu: 0.0.40
codegen_flags: <defaults>
</compile_context>

<pallas_src>
import functools

import jax
import jax.numpy as jnp
from jax.experimental import pallas as pl
from jax.experimental.pallas import tpu as pltpu


def _attention_kernel(x_ref, w_ref, b_ref, o_ref, *, use_mxu):
    # x_ref: (C, TILE_HW) input dtype; w_ref: (C, 1) f32; b_ref: (1,) f32 SMEM
    x = x_ref[...]
    w = w_ref[...].astype(x.dtype)                       # tiny, stays in vregs
    if use_mxu:
        # Large C: contract over C on the otherwise-idle MXU.
        att = jax.lax.dot_general(
            w, x, dimension_numbers=(((0,), (0,)), ((), ())),
            preferred_element_type=jnp.float32)          # (1, TILE_HW) f32
    else:
        # Small C: multiply in input dtype (bf16-native VPU), accumulate in f32.
        att = jnp.sum(x * w, axis=0, keepdims=True, dtype=jnp.float32)
    gate = jax.nn.sigmoid(att + b_ref[0])                # f32, EUP
    o_ref[...] = x * gate.astype(x.dtype)                # broadcast gate over C


def _per_block_target_bytes():
    kind = ""
    try:
        kind = jax.devices()[0].device_kind.lower()
    except Exception:
        pass
    if "v7" in kind or "7x" in kind:
        return 6 << 20   # 3.2 TB/s: bigger blocks amortize ~0.35us/step overhead
    if "v6" in kind:
        return 4 << 20
    return 2 << 20       # v5e & older: ~roofline already at 2 MiB, tight VMEM


def attention_module(x_nchw, weight, bias):
    """x_nchw: (B, C, H, W); weight: (C,); bias: scalar."""
    B, C, H, W = x_nchw.shape
    hw = H * W
    x_rows = x_nchw.reshape(B, C, hw)            # free reshape, no transpose

    itemsize = jnp.dtype(x_nchw.dtype).itemsize
    sublane = max(8, 32 // max(itemsize, 1))     # 8 f32 / 16 bf16 / 32 int8
    padded_c = ((C + sublane - 1) // sublane) * sublane

    # Lane-dense tile sized from the *padded* per-block footprint.
    target_elems = _per_block_target_bytes() // itemsize
    tile_hw = max(128, (target_elems // padded_c) // 128 * 128)
    if hw < 128:
        tile_hw = hw                              # full extent satisfies (8,128) rule
    else:
        tile_hw = min(tile_hw, (hw // 128) * 128)  # never exceed the array extent
        # v7x megacore occupancy: keep >= ~8 grid points so both TCs stay busy.
        while tile_hw > 128 and B * pl.cdiv(hw, tile_hw) < 8:
            tile_hw = max(128, (tile_hw // 2) // 128 * 128)

    grid = (B, pl.cdiv(hw, tile_hw))

    # Real double-buffered VMEM footprint: 2 buffers x (input + output) blocks,
    # plus headroom for the tiny weight block / internal scratch.
    block_bytes = padded_c * tile_hw * itemsize
    vmem_limit = int(min(64 << 20, max(2 * 2 * block_bytes + (2 << 20), 16 << 20)))

    w2d = weight.reshape(C, 1).astype(jnp.float32)
    b1 = jnp.asarray(bias, dtype=jnp.float32).reshape(1)

    kernel = functools.partial(_attention_kernel, use_mxu=(C >= 128))

    out_rows = pl.pallas_call(
        kernel,
        out_shape=jax.ShapeDtypeStruct((B, C, hw), x_nchw.dtype),
        grid_spec=pltpu.PrefetchScalarGridSpec(
            num_scalar_prefetch=0,
            grid=grid,
            in_specs=[
                # batch squeezed; lane-dense (C, tile_hw) block
                pl.BlockSpec((None, C, tile_hw), lambda b, t: (b, 0, t)),
                # tiny weight block, constant index -> DMA'd once
                pl.BlockSpec((C, 1), lambda b, t: (0, 0)),
                # scalar bias in SMEM (no (8,128) VMEM padding)
                pl.BlockSpec(memory_space=pltpu.MemorySpace.SMEM),
            ],
            out_specs=pl.BlockSpec((None, C, tile_hw), lambda b, t: (b, 0, t)),
        ),
        compiler_params=pltpu.CompilerParams(
            dimension_semantics=("parallel", "parallel"),
            vmem_limit_bytes=vmem_limit),
    )(x_rows, w2d, b1)

    return out_rows.reshape(B, C, H, W)


def _reference(x_nchw, weight, bias):
    # pure-JAX reference of the PyTorch forward
    att = jnp.einsum("bchw,c->bhw", x_nchw, weight) + bias   # 1x1 conv, out_ch=1
    att = jax.nn.sigmoid(att)[:, None, :, :]
    return x_nchw * att


if __name__ == "__main__":
    key = jax.random.PRNGKey(0)
    k_x, k_w, k_b = jax.random.split(key, 3)

    B, C, H, W = 2, 4, 16, 16
    x = jax.random.normal(k_x, (B, C, H, W), dtype=jnp.float32)

    # deterministic Conv2d(in_channels, 1, kernel_size=1) params
    fan_in = C  # 1x1 kernel
    bound = 1.0 / (fan_in ** 0.5)
    weight = jax.random.uniform(k_w, (C,), minval=-bound, maxval=bound,
                                dtype=jnp.float32)
    bias = jax.random.uniform(k_b, (), minval=-bound, maxval=bound,
                              dtype=jnp.float32)

    out = jax.block_until_ready(attention_module(x, weight, bias))
    ref = _reference(x, weight, bias)
    assert out.shape == (B, C, H, W)
    assert jnp.allclose(out, ref, atol=1e-5, rtol=1e-5)

    # Exercise the no-pad partial-HW-block path (hw not a multiple of 128).
    H2, W2 = 15, 15
    x2 = jax.random.normal(k_x, (B, C, H2, W2), dtype=jnp.float32)
    out2 = jax.block_until_ready(attention_module(x2, weight, bias))
    ref2 = _reference(x2, weight, bias)
    assert jnp.allclose(out2, ref2, atol=1e-5, rtol=1e-5)

    print("KERNEL_OK")
</pallas_src>

<mosaic_0001>
module attributes {stable_mosaic.version = 11 : i64} {
  func.func @_attention_kernel(%arg0: i32, %arg1: i32, %arg2: memref<1x4x128xf32, #tpu.memory_space<vmem>>, %arg3: memref<4x1xf32, #tpu.memory_space<vmem>>, %arg4: memref<1xf32, #tpu.memory_space<smem>>, %arg5: memref<1x4x128xf32, #tpu.memory_space<vmem>>) attributes {dimension_semantics = [#tpu.dimension_semantics<parallel>, #tpu.dimension_semantics<parallel>], iteration_bounds = array<i64: 2, 2>, scalar_prefetch = 0 : i64, scratch_operands = 0 : i64, tpu.core_type = #tpu.core_type<tc>, window_params = [{transform_indices = @transform_0, window_bounds = array<i64: 1, 4, 128>}, {pipeline_mode = #tpu.pipeline_mode<synchronous>, transform_indices = @transform_1, window_bounds = array<i64: 4, 1>}, {transform_indices = @transform_2, window_bounds = array<i64: 1>}, {transform_indices = @transform_3, window_bounds = array<i64: 1, 4, 128>}]} {
    %c0 = arith.constant 0 : index
    %c0_0 = arith.constant 0 : index
    %c0_1 = arith.constant 0 : index
    %0 = vector.load %arg2[%c0, %c0_0, %c0_1] : memref<1x4x128xf32, #tpu.memory_space<vmem>>, vector<1x4x128xf32>
    %1 = vector.shape_cast %0 : vector<1x4x128xf32> to vector<4x128xf32>
    %c0_2 = arith.constant 0 : index
    %c0_3 = arith.constant 0 : index
    %2 = vector.load %arg3[%c0_2, %c0_3] : memref<4x1xf32, #tpu.memory_space<vmem>>, vector<4x1xf32>
    %3 = vector.broadcast %2 : vector<4x1xf32> to vector<4x128xf32>
    %4 = arith.mulf %1, %3 : vector<4x128xf32>
    %cst = arith.constant dense<0.000000e+00> : vector<128xf32>
    %5 = vector.multi_reduction <add>, %4, %cst [0] : vector<4x128xf32> to vector<128xf32>
    %6 = vector.shape_cast %5 : vector<128xf32> to vector<1x128xf32>
    %c0_4 = arith.constant 0 : index
    %7 = memref.load %arg4[%c0_4] : memref<1xf32, #tpu.memory_space<smem>>
    %8 = vector.broadcast %7 : f32 to vector<1x128xf32>
    %9 = arith.addf %6, %8 : vector<1x128xf32>
    %10 = arith.negf %9 : vector<1x128xf32>
    %11 = math.exp %10 : vector<1x128xf32>
    %cst_5 = arith.constant 1.000000e+00 : f32
    %12 = vector.broadcast %cst_5 : f32 to vector<1x128xf32>
    %13 = arith.addf %12, %11 : vector<1x128xf32>
    %14 = arith.divf %12, %13 : vector<1x128xf32>
    %15 = vector.broadcast %14 : vector<1x128xf32> to vector<4x128xf32>
    %16 = arith.mulf %1, %15 : vector<4x128xf32>
    %c0_6 = arith.constant 0 : index
    %c0_7 = arith.constant 0 : index
    %c0_8 = arith.constant 0 : index
    %17 = vector.load %arg5[%c0_6, %c0_7, %c0_8] : memref<1x4x128xf32, #tpu.memory_space<vmem>>, vector<1x4x128xf32>
    %18 = vector.shape_cast %17 : vector<1x4x128xf32> to vector<4x128xf32>
    %19 = vector.shape_cast %16 : vector<4x128xf32> to vector<1x4x128xf32>
    tpu.vector_store %arg5[%c0_6, %c0_7, %c0_8], %19 {strides = array<i32>} : memref<1x4x128xf32, #tpu.memory_space<vmem>>, vector<1x4x128xf32>,
    return
  }
  func.func @transform_0(%arg0: i32, %arg1: i32) -> (i32, i32, i32) {
    %c0_i32 = arith.constant 0 : i32
    %c0_i32_0 = arith.constant 0 : i32
    return %arg0, %c0_i32, %arg1 : i32, i32, i32
  }
  func.func @transform_1(%arg0: i32, %arg1: i32) -> (i32, i32) {
    %c0_i32 = arith.constant 0 : i32
    %c0_i32_0 = arith.constant 0 : i32
    %c0_i32_1 = arith.constant 0 : i32
    return %c0_i32, %c0_i32_0 : i32, i32
  }
  func.func @transform_2(%arg0: i32, %arg1: i32) -> i32 {
    %c0_i32 = arith.constant 0 : i32
    %c0_i32_0 = arith.constant 0 : i32
    return %c0_i32 : i32
  }
  func.func @transform_3(%arg0: i32, %arg1: i32) -> (i32, i32, i32) {
    %c0_i32 = arith.constant 0 : i32
    %c0_i32_0 = arith.constant 0 : i32
    return %arg0, %c0_i32, %arg1 : i32, i32, i32
  }
}

</mosaic_0001>

<llo_original>
// kernel: tpu_custom_call.1
$region0: #{tpu_custom_call.1}
  #allocation0 [shape = 'u32[]', space=smem, size = 0x4, offset = 0x4, fixed_abs, tag = 'smem constant byte address 0x4 - core index']
  #allocation1 [shape = 'u32[144,128]{1,0:T(1,128)}', space=vmem, size = 0x12000, scoped, tag = 'internal scratch']
  #allocation2 [shape = 'f32[1]{0:T(128)S(6)}', space=smem, size = 0x200, scoped, tag = 'scoped memory for tpu_custom_call.1']
  %s0 = inlined_call_operand.hbm [shape: f32[2,4,256], index: 0, kind: input, shape index: {}]
  %s1 = inlined_call_operand.vmem [shape: f32[4,1], index: 1, kind: input, shape index: {}]
  %s2 = inlined_call_operand.<no memory space> [shape: f32[1], index: 2, kind: input, shape index: {}]
  %s3 = inlined_call_operand.hbm [shape: f32[2,4,256], index: 3, kind: output, shape index: {}]
  %s4 = sld [smem:[#allocation0]]
  $region49: #{tpu_custom_call.1} parent=0
    _
  %s6 = ssub.s32 1, %s4
  %s7 = scalar_select 0, %s6, %s4
  %8 = sst [smem:[#allocation2]] %s2
  $region1: #{tpu_custom_call.1} parent=0
    #allocation3 [shape = 'u8[4096]{0}', space=vmem, size = 0x1000, scoped, tag = 'input window, operand 0']
    #allocation4 [shape = 's32[2]{0}', space=sflag, size = 0x8, scoped, tag = 'scoped memory for tpu_custom_call.1']
    #allocation5 [shape = 's32[2]{0}', space=sflag, size = 0x8, scoped, tag = 'scoped memory for tpu_custom_call.1']
    #allocation6 [shape = 'u8[4096]{0}', space=vmem, size = 0x1000, scoped, tag = 'output window, operand 0']
    %9 = vsyncpa [#allocation4], 0
    %s10 = scalar_lea.sflag [#allocation4], 1
    %11 = vsyncpa %s10, 0
    %12 = vsyncpa [#allocation5], 0
    %s13 = scalar_lea.sflag [#allocation5], 1
    %14 = vsyncpa %s13, 0
    loop: start=0, step=1, limit=6
    $region2: #{tpu_custom_call.1} parent=1 // loop_pre_header
      _
    $region3: #{tpu_custom_call.1} parent=1 // loop_header
      %s16 = sphi 0, %s20
      %p17 = scmp.ge.s32.totalorder %s16, 6
      %s23 = sphi 0, %s35
      %s24 = sphi 0, %s31
      %s25 = sphi 0, %s23
      %s26 = sphi 0, %s24
      %s27 = sphi 0, %s25
      %s28 = sphi 0, %s26
      %s40 = sphi 0, %s42
      %s43 = sphi 0, %s40
      %s44 = sphi 0, %s43
      %s60 = sphi 0, %s44
      %s64 = sphi 0, %s64
      %s66 = sphi 0, %s64
      %s67 = sphi 0, %s66
      %s81 = sphi 0, %s67
      %s85 = sphi 0, %s85
      %s87 = sphi 0, %s85
      %s88 = sphi 0, %s87
      %s102 = sphi 0, %s88
      %s110 = sphi 0, %s112
      %s113 = sphi 0, %s110
      %s114 = sphi 0, %s113
      %s130 = sphi 0, %s114
    $region4: #{tpu_custom_call.1} parent=1 // loop_header_branch
      %19 = sbr.rel (%p17) target = $region8
    $region5: #{tpu_custom_call.1} parent=1 // loop_body
      %s21 = ssub.s32 %s16, 1
      %s22 = ssub.s32 %s16, 2
      %s29 = sadd.s32 1, %s24
      %p30 = scmp.ge.s32.totalorder %s29, 2
      %s31 = scalar_select %p30, 0, %s29
      %s32 = sadd.s32 1, %s23
      %s33 = scalar_select %p30, %s32, %s23
      %p34 = scmp.ge.s32.totalorder %s33, 2
      %s35 = scalar_select %p34, 0, %s33
      %s36 = ssub.s32 %s23, %s35
      %s37 = ssub.s32 %s24, %s31
      %s38 = sor.u32 %s36, %s37
      %p39 = scmp.eq.s32.totalorder %s38, 0
      %s41 = sadd.s32 %s40, 1
      %s42 = scalar_select %p39, %s40, %s41
      %p45 = pneg %p39
      %p46 = scmp.eq.s32.totalorder %s16, 3
      %p47 = por %p45, %p46
      %p48 = scmp.ne.s32.totalorder %s40, %s43
      %p49 = scmp.eq.s32.totalorder %s16, 0
      %p50 = por %p48, %p49
      %p51 = scmp.ne.s32.totalorder %s40, %s43
      %p52 = scmp.eq.s32.totalorder %s21, 3
      %p53 = por %p51, %p52
      %p54 = scmp.ne.s32.totalorder %s43, %s44
      %p55 = scmp.eq.s32.totalorder %s21, 0
      %p56 = por %p54, %p55
      %p57 = scmp.ne.s32.totalorder %s43, %s44
      %p58 = scmp.eq.s32.totalorder %s22, 3
      %p59 = por %p57, %p58
      %p61 = scmp.ne.s32.totalorder %s44, %s60
      %p62 = scmp.eq.s32.totalorder %s22, 0
      %p63 = por %p61, %p62
      %s65 = sadd.s32 %s64, 1
      %p68 = scmp.eq.s32.totalorder %s16, 3
      %p69 = scmp.ne.s32.totalorder %s64, %s66
      %p70 = scmp.eq.s32.totalorder %s16, 0
      %p71 = por %p69, %p70
      %p72 = scmp.ne.s32.totalorder %s64, %s66
      %p73 = scmp.eq.s32.totalorder %s21, 3
      %p74 = por %p72, %p73
      %p75 = scmp.ne.s32.totalorder %s66, %s67
      %p76 = scmp.eq.s32.totalorder %s21, 0
      %p77 = por %p75, %p76
      %p78 = scmp.ne.s32.totalorder %s66, %s67
      %p79 = scmp.eq.s32.totalorder %s22, 3
      %p80 = por %p78, %p79
      %p82 = scmp.ne.s32.totalorder %s67, %s81
      %p83 = scmp.eq.s32.totalorder %s22, 0
      %p84 = por %p82, %p83
      %s86 = sadd.s32 %s85, 1
      %p89 = scmp.eq.s32.totalorder %s16, 3
      %p90 = scmp.ne.s32.totalorder %s85, %s87
      %p91 = scmp.eq.s32.totalorder %s16, 0
      %p92 = por %p90, %p91
      %p93 = scmp.ne.s32.totalorder %s85, %s87
      %p94 = scmp.eq.s32.totalorder %s21, 3
      %p95 = por %p93, %p94
      %p96 = scmp.ne.s32.totalorder %s87, %s88
      %p97 = scmp.eq.s32.totalorder %s21, 0
      %p98 = por %p96, %p97
      %p99 = scmp.ne.s32.totalorder %s87, %s88
      %p100 = scmp.eq.s32.totalorder %s22, 3
      %p101 = por %p99, %p100
      %p103 = scmp.ne.s32.totalorder %s88, %s102
      %p104 = scmp.eq.s32.totalorder %s22, 0
      %p105 = por %p103, %p104
      %s106 = ssub.s32 %s23, %s35
      %s107 = ssub.s32 %s24, %s31
      %s108 = sor.u32 %s106, %s107
      %p109 = scmp.eq.s32.totalorder %s108, 0
      %s111 = sadd.s32 %s110, 1
      %s112 = scalar_select %p109, %s110, %s111
      %p115 = pneg %p109
      %p116 = scmp.eq.s32.totalorder %s16, 3
      %p117 = por %p115, %p116
      %p118 = scmp.ne.s32.totalorder %s110, %s113
      %p119 = scmp.eq.s32.totalorder %s16, 0
      %p120 = por %p118, %p119
      %p121 = scmp.ne.s32.totalorder %s110, %s113
      %p122 = scmp.eq.s32.totalorder %s21, 3
      %p123 = por %p121, %p122
      %p124 = scmp.ne.s32.totalorder %s113, %s114
      %p125 = scmp.eq.s32.totalorder %s21, 0
      %p126 = por %p124, %p125
      %p127 = scmp.ne.s32.totalorder %s113, %s114
      %p128 = scmp.eq.s32.totalorder %s22, 3
      %p129 = por %p127, %p128
      %p131 = scmp.ne.s32.totalorder %s114, %s130
      %p132 = scmp.eq.s32.totalorder %s22, 0
      %p133 = por %p131, %p132
      %p134 = scmp.le.s32.totalorder 1, %s16
      %p135 = scmp.lt.s32.totalorder %s16, 5
      %p136 = pnand %p134, %p135
      %p137 = pneg %p136
      // Predicated region
      $region9: #{tpu_custom_call.1} parent=5 // pred_check
        _
      $region10: #{tpu_custom_call.1} parent=5 // pred_check_branch
        %139 = sbr.rel (%p136) target = $region12
      $region11: #{tpu_custom_call.1} parent=5 // pred_region
        %s140 = ssub.s32 %s16, 1
        // Predicated region
        $region13: #{tpu_custom_call.1} parent=11 // pred_check
          %p141 = pneg %p77
        $region14: #{tpu_custom_call.1} parent=11 // pred_check_branch
          %143 = sbr.rel (%p141) target = $region16
        $region15: #{tpu_custom_call.1} parent=11 // pred_region
          _
        $region16: #{tpu_custom_call.1} parent=11 // pred_fallthru
          _
        // Predicated region
        $region17: #{tpu_custom_call.1} parent=11 // pred_check
          %p144 = pneg %p98
        $region18: #{tpu_custom_call.1} parent=11 // pred_check_branch
          %146 = sbr.rel (%p144) target = $region20
        $region19: #{tpu_custom_call.1} parent=11 // pred_region
          _
        $region20: #{tpu_custom_call.1} parent=11 // pred_fallthru
          _
      $region12: #{tpu_custom_call.1} parent=5 // pred_fallthru
        _
      %p147 = scmp.lt.s32.totalorder %s16, 4
      // Predicated region
      $region21: #{tpu_custom_call.1} parent=5 // pred_check
        %p148 = pneg %p147
      $region22: #{tpu_custom_call.1} parent=5 // pred_check_branch
        %150 = sbr.rel (%p148) target = $region24
      $region23: #{tpu_custom_call.1} parent=5 // pred_region
        // Predicated region
        $region25: #{tpu_custom_call.1} parent=23 // pred_check
          %p151 = pneg %p50
        $region26: #{tpu_custom_call.1} parent=23 // pred_check_branch
          %153 = sbr.rel (%p151) target = $region28
        $region27: #{tpu_custom_call.1} parent=23 // pred_region
          %s154 = sand.u32 %s40, 1
          %s155 = scalar_lea.sflag [#allocation4], %s154
          %s156 = sand.u32 %s40, 1
          %s157 = smul.addr %s156, 4
          %s158 = scalar_lea.vmem [#allocation3], %s157
          %s160 = ssub.s32 64, 64
          %161 = vsyncadd %s155, %s160
          %s162 = smul.addr %s23, 2
          %s163 = sadd.s32 %s24, %s162
          %s164 = smul.addr %s163, 64
          %s165 = scalar_lea.hbm %s0, %s164
          %s167 = sshll.u32 %s158, 4
          %s168 = int_to_ptr.vmem [resolvable:$true] %s167
          %170 = dma.hbm_to_vmem [thread:$0]  %s165, 64, %s168, %s155
        $region28: #{tpu_custom_call.1} parent=23 // pred_fallthru
          _
      $region24: #{tpu_custom_call.1} parent=5 // pred_fallthru
        _
      %p171 = scmp.le.s32.totalorder 1, %s16
      %p172 = scmp.lt.s32.totalorder %s16, 5
      %p173 = pnand %p171, %p172
      %p174 = pneg %p173
      // Predicated region
      $region29: #{tpu_custom_call.1} parent=5 // pred_check
        _
      $region30: #{tpu_custom_call.1} parent=5 // pred_check_branch
        %176 = sbr.rel (%p173) target = $region32
      $region31: #{tpu_custom_call.1} parent=5 // pred_region
        %s177 = ssub.s32 %s16, 1
        %s178 = sand.u32 %s43, 1
        %s179 = scalar_lea.sflag [#allocation4], %s178
        %s180 = sand.u32 %s43, 1
        %s181 = smul.addr %s180, 4
        %s182 = scalar_lea.vmem [#allocation3], %s181
        // Predicated region
        $region33: #{tpu_custom_call.1} parent=31 // pred_check
          %p183 = pneg %p56
        $region34: #{tpu_custom_call.1} parent=31 // pred_check_branch
          %185 = sbr.rel (%p183) target = $region36
        $region35: #{tpu_custom_call.1} parent=31 // pred_region
          %186 = dma.done %s179, 64
        $region36: #{tpu_custom_call.1} parent=31 // pred_fallthru
          _
        %s187 = sand.u32 %s43, 1
        %s188 = scalar_lea.sflag [#allocation4], %s187
        %s189 = sand.u32 %s43, 1
        %s190 = smul.addr %s189, 4
        %s191 = scalar_lea.vmem [#allocation3], %s190
        %p192 = pneg %p56
        %p193 = pneg %p53
        %p194 = pneg %p77
        %p195 = pneg %p74
        %p196 = pneg %p98
        %p197 = pneg %p95
        %p198 = pneg %p126
        %p199 = pneg %p123
        %s200 = sand.u32 %s113, 1
        %s201 = scalar_lea.sflag [#allocation5], %s200
        %s202 = sand.u32 %s113, 1
        %s203 = smul.addr %s202, 4
        %s204 = scalar_lea.vmem [#allocation6], %s203
        %v205 = vld [vmem:[%s182] sm:$0xf]
        %v206 = vld [vmem:[%s1] sm:$0xf]
        %208 = vset.pattern.permute.xlu0 0
        %209 = vperm.xlu0 %208, %v206
        %v210 = vpop.permute.xlu0 %209
        %v212 = vmul.f32 %v205, %v210
        %vm213 = vcmask 1043456
        %v214 = vsel %vm213, %v212, 0.0
        %v215 = vrot.slane %v214, 4
        %v216 = vadd.f32 %v214, %v215
        %v217 = vrot.slane %v216, 2
        %v218 = vadd.f32 %v216, %v217
        %v219 = vrot.slane %v218, 1
        %v220 = vadd.f32 %v218, %v219
        %s221 = sld [smem:[#allocation2]]
        %v222 = vstv %s221
        %v223 = vadd.f32 %v220, %v222
        %v224 = vxor.u32 %v223, 2147483648
        %v225 = vmul.f32 %v224, 1.442695
        %v226 = vpow.pop %v225
        %v227 = vadd.f32 %v226, 1.0
        %v228 = vrcp.pop %v227
        %v229 = vmul.f32 1.0, %v228
        %v230 = vmul.f32 %v205, %v229
        %231 = vst [vmem:[%s204] sm:$0xf] %v230
        %s232 = sand.u32 %s113, 1
        %s233 = scalar_lea.sflag [#allocation5], %s232
        %s234 = sand.u32 %s113, 1
        %s235 = smul.addr %s234, 4
        %s236 = scalar_lea.vmem [#allocation6], %s235
        // Predicated region
        $region37: #{tpu_custom_call.1} parent=31 // pred_check
          %p237 = pneg %p123
        $region38: #{tpu_custom_call.1} parent=31 // pred_check_branch
          %239 = sbr.rel (%p237) target = $region40
        $region39: #{tpu_custom_call.1} parent=31 // pred_region
          %s241 = ssub.s32 64, 64
          %242 = vsyncadd %s233, %s241
          %s243 = smul.addr %s25, 2
          %s244 = sadd.s32 %s26, %s243
          %s245 = smul.addr %s244, 64
          %s246 = scalar_lea.hbm %s3, %s245
          %s248 = sshll.u32 %s236, 4
          %s249 = int_to_ptr.vmem [resolvable:$true] %s248
          %251 = dma.vmem_to_hbm [thread:$0]  %s249, 64, %s246, %s233
        $region40: #{tpu_custom_call.1} parent=31 // pred_fallthru
          _
      $region32: #{tpu_custom_call.1} parent=5 // pred_fallthru
        _
      %p252 = scmp.le.s32.totalorder 2, %s16
      // Predicated region
      $region41: #{tpu_custom_call.1} parent=5 // pred_check
        %p253 = pneg %p252
      $region42: #{tpu_custom_call.1} parent=5 // pred_check_branch
        %255 = sbr.rel (%p253) target = $region44
      $region43: #{tpu_custom_call.1} parent=5 // pred_region
        %s256 = ssub.s32 %s16, 2
        // Predicated region
        $region45: #{tpu_custom_call.1} parent=43 // pred_check
          %p257 = pneg %p129
        $region46: #{tpu_custom_call.1} parent=43 // pred_check_branch
          %259 = sbr.rel (%p257) target = $region48
        $region47: #{tpu_custom_call.1} parent=43 // pred_region
          %s260 = sand.u32 %s114, 1
          %s261 = scalar_lea.sflag [#allocation5], %s260
          %s262 = sand.u32 %s114, 1
          %s263 = smul.addr %s262, 4
          %s264 = scalar_lea.vmem [#allocation6], %s263
          %265 = dma.done %s261, 64
        $region48: #{tpu_custom_call.1} parent=43 // pred_fallthru
          _
      $region44: #{tpu_custom_call.1} parent=5 // pred_fallthru
        _
    $region6: #{tpu_custom_call.1} parent=1 // loop_footer
      %s20 = sadd.s32 1, %s16
    $region7: #{tpu_custom_call.1} parent=1 // loop_footer_branch
      %15 = sbr.rel target = $region3
    $region8: #{tpu_custom_call.1} parent=1 // loop_exit
      _
    %266 = vsyncpa [#allocation4], 1
    %s267 = scalar_lea.sflag [#allocation4], 1
    %268 = vsyncpa %s267, 1
    %269 = vsyncpa [#allocation5], 1
    %s270 = scalar_lea.sflag [#allocation5], 1
    %271 = vsyncpa %s270, 1

</llo_original>
